<compile_context>
chip_gen: v5e
topology: v5e:2x2
jax: 0.10.0
libtpu: 0.0.40
codegen_flags: <defaults>
</compile_context>

<pallas_src>
import jax
import jax.numpy as jnp
from jax.experimental import pallas as pl
from jax.experimental.pallas import tpu as pltpu


# ------------------------------ helpers -------------------------------------

def _round_up(v: int, m: int) -> int:
    return (v + m - 1) // m * m


def _vmem_budget_and_cores():
    """Generation-aware VMEM capacity / TC count with a safe fallback."""
    vmem = 64 << 20        # v7x has the smallest VMEM (64 MiB); safe lower bound
    cores = 1
    try:
        info = pltpu.get_tpu_info()
        vmem = int(getattr(info, "vmem_capacity_bytes", vmem) or vmem)
        cores = int(getattr(info, "num_cores", cores) or cores)
    except Exception:
        pass
    return vmem, cores


def _choose_batch_tile(batch: int, row_bytes: int) -> int:
    """Batch-tile chooser.

    - multiple of 8 (or the whole batch when batch <= 8) to satisfy the
      (8, 128) sublane rule,
    - small enough that the double-buffered in+out footprint stays well below
      the default scoped-VMEM limit on every generation,
    - small enough to leave >= max(4, 2*num_cores) pipelined grid steps when
      the batch allows (pipelining + megacore / 2-TC sharding).
    """
    if batch <= 8:
        return batch
    vmem, cores = _vmem_budget_and_cores()
    # Budget for one (input tile + output tile) pair; x2 double-buffering keeps
    # the footprint < 16 MiB on every generation's default scoped limit.
    budget = min(vmem // 8, 6 << 20)
    budget_rows = max(8, budget // max(row_bytes, 1))
    steps = max(4, 2 * cores)
    target_rows = max(8, pl.cdiv(batch, steps))
    tb = min(batch, budget_rows, target_rows)
    tb = max(8, tb - (tb % 8))
    return tb


# ------------------------------- kernels ------------------------------------

def _make_rsoftmax_kernel(radix: int, cardinality: int, r: int):
    """Kernel over lane-dense (TB, N) tiles, N = cardinality*radix*r.

    Input lane order is the natural (card, radix, r); output lane order is the
    PyTorch post-transpose (radix, card, r).  Softmax is over the radix axis,
    computed elementwise across static lane slices (VPU + EUP only, no
    cross-lane reductions), with exact f32 math.  The output tile is assembled
    with one concatenate -> a single full-width unmasked store per grid step.
    """

    def kernel(x_ref, o_ref):
        probs = [[None] * cardinality for _ in range(radix)]
        for c in range(cardinality):
            base = c * radix * r
            xs = [x_ref[:, pl.ds(base + j * r, r)].astype(jnp.float32)
                  for j in range(radix)]
            m = xs[0]
            for xj in xs[1:]:
                m = jnp.maximum(m, xj)
            es = [jnp.exp(xj - m) for xj in xs]
            s = es[0]
            for ej in es[1:]:
                s = s + ej
            inv = 1.0 / s          # exact; kernel is HBM-bound, the divide is free
            for j in range(radix):
                probs[j][c] = (es[j] * inv).astype(o_ref.dtype)
        # Assemble in output (radix, card, r) lane order -> ONE full-width store.
        parts = [probs[j][c] for j in range(radix) for c in range(cardinality)]
        o_ref[...] = jnp.concatenate(parts, axis=-1)

    return kernel


def _sigmoid_kernel(x_ref, o_ref):
    x = x_ref[...].astype(jnp.float32)
    o_ref[...] = (1.0 / (1.0 + jnp.exp(-x))).astype(o_ref.dtype)


# ------------------------------- wrapper ------------------------------------

def rsoftmax(x, radix: int, cardinality: int):
    """Pallas implementation of rSoftMax.forward.

    x: (batch, channels, H, W) NCHW (typically H = W = 1 with
       channels = cardinality * radix * r_chan).
    Returns:
      radix > 1 : (batch, channels*H*W) array, softmax'd over radix and
                  flattened in (radix, cardinality, r) order (PyTorch order).
      radix == 1: sigmoid(x) with the original shape.
    """
    batch = x.shape[0]
    n = 1
    for d in x.shape[1:]:
        n *= d
    itemsize = jnp.dtype(x.dtype).itemsize

    if radix > 1:
        assert n % (cardinality * radix) == 0, (
            "channels*H*W must be divisible by cardinality*radix")
        r = n // (cardinality * radix)

        # Free view: natural NCHW flatten has (card, radix, r) lane order.
        x2 = x.reshape(batch, n)
        row_bytes = 2 * _round_up(n, 128) * itemsize        # in + out rows
        tb = _choose_batch_tile(batch, row_bytes)

        out2 = pl.pallas_call(
            _make_rsoftmax_kernel(radix, cardinality, r),
            out_shape=jax.ShapeDtypeStruct((batch, n), x.dtype),
            grid=(pl.cdiv(batch, tb),),
            in_specs=[pl.BlockSpec((tb, n), lambda b: (b, 0))],
            out_specs=pl.BlockSpec((tb, n), lambda b: (b, 0)),
            compiler_params=pltpu.CompilerParams(
                dimension_semantics=("parallel",)),
        )(x2)
        # Already flattened in PyTorch (radix, card, r) order.
        return out2
    else:
        orig_shape = x.shape
        x2 = x.reshape(batch, n)                             # lane-dense 2D view
        row_bytes = 2 * _round_up(n, 128) * itemsize
        tb = _choose_batch_tile(batch, row_bytes)

        out2 = pl.pallas_call(
            _sigmoid_kernel,
            out_shape=jax.ShapeDtypeStruct((batch, n), x.dtype),
            grid=(pl.cdiv(batch, tb),),
            in_specs=[pl.BlockSpec((tb, n), lambda b: (b, 0))],
            out_specs=pl.BlockSpec((tb, n), lambda b: (b, 0)),
            compiler_params=pltpu.CompilerParams(
                dimension_semantics=("parallel",)),
        )(x2)
        return out2.reshape(orig_shape)


# --------------------------- pure-JAX reference ------------------------------

def rsoftmax_ref(x, radix: int, cardinality: int):
    batch = x.shape[0]
    if radix > 1:
        x4 = x.reshape(batch, cardinality, radix, -1)
        x4 = jnp.transpose(x4, (0, 2, 1, 3))
        x4 = jax.nn.softmax(x4.astype(jnp.float32), axis=1).astype(x.dtype)
        return x4.reshape(batch, -1)
    return jax.nn.sigmoid(x)


# --------------------------------- main --------------------------------------

if __name__ == "__main__":
    key = jax.random.PRNGKey(0)
    k1, k2, k3 = jax.random.split(key, 3)

    ATOL, RTOL = 1e-5, 1e-5          # exact math in the kernel; ~ulp-level match

    # (1) radix=2, cardinality=2, batch=16 -> multi-step grid (pipelined).
    batch, cardinality, radix, r_chan = 16, 2, 2, 16
    channels = cardinality * radix * r_chan                  # 64
    x = jax.random.normal(k1, (batch, channels, 1, 1), dtype=jnp.float32)
    out = jax.block_until_ready(rsoftmax(x, radix=radix, cardinality=cardinality))
    ref = rsoftmax_ref(x, radix=radix, cardinality=cardinality)
    assert out.shape == (batch, channels)
    assert jnp.allclose(out, ref, atol=ATOL, rtol=RTOL), "radix=2/card=2 mismatch"

    # (2) radix=4, cardinality=1 (common ResNeSt config: no lane permutation).
    batch, cardinality, radix, r_chan = 8, 1, 4, 32
    channels = cardinality * radix * r_chan                  # 128
    x = jax.random.normal(k2, (batch, channels, 1, 1), dtype=jnp.float32)
    out = jax.block_until_ready(rsoftmax(x, radix=radix, cardinality=cardinality))
    ref = rsoftmax_ref(x, radix=radix, cardinality=cardinality)
    assert out.shape == (batch, channels)
    assert jnp.allclose(out, ref, atol=ATOL, rtol=RTOL), "radix=4/card=1 mismatch"

    # (3) radix == 1 -> sigmoid, original shape preserved.
    x1 = jax.random.normal(k3, (2, 8, 4, 4), dtype=jnp.float32)
    out1 = jax.block_until_ready(rsoftmax(x1, radix=1, cardinality=1))
    ref1 = rsoftmax_ref(x1, radix=1, cardinality=1)
    assert out1.shape == x1.shape
    assert jnp.allclose(out1, ref1, atol=ATOL, rtol=RTOL), "radix=1 mismatch"

    print("KERNEL_OK")
</pallas_src>

<mosaic_0001>
module attributes {stable_mosaic.version = 11 : i64} {
  func.func @kernel(%arg0: i32, %arg1: memref<8x64xf32, #tpu.memory_space<vmem>>, %arg2: memref<8x64xf32, #tpu.memory_space<vmem>>) attributes {dimension_semantics = [#tpu.dimension_semantics<parallel>], iteration_bounds = array<i64: 2>, scalar_prefetch = 0 : i64, scratch_operands = 0 : i64, tpu.core_type = #tpu.core_type<tc>, window_params = [{transform_indices = @transform_0, window_bounds = array<i64: 8, 64>}, {transform_indices = @transform_1, window_bounds = array<i64: 8, 64>}]} {
    %c0 = arith.constant 0 : index
    %c0_0 = arith.constant 0 : index
    %0 = vector.load %arg1[%c0, %c0_0] : memref<8x64xf32, #tpu.memory_space<vmem>>, vector<8x16xf32>
    %c0_1 = arith.constant 0 : index
    %c16 = arith.constant 16 : index
    %1 = vector.load %arg1[%c0_1, %c16] : memref<8x64xf32, #tpu.memory_space<vmem>>, vector<8x16xf32>
    %2 = arith.maximumf %0, %1 : vector<8x16xf32>
    %3 = arith.subf %0, %2 : vector<8x16xf32>
    %4 = math.exp %3 : vector<8x16xf32>
    %5 = arith.subf %1, %2 : vector<8x16xf32>
    %6 = math.exp %5 : vector<8x16xf32>
    %7 = arith.addf %4, %6 : vector<8x16xf32>
    %cst = arith.constant 1.000000e+00 : f32
    %8 = vector.broadcast %cst : f32 to vector<8x16xf32>
    %9 = arith.divf %8, %7 : vector<8x16xf32>
    %10 = arith.mulf %4, %9 : vector<8x16xf32>
    %11 = arith.mulf %6, %9 : vector<8x16xf32>
    %c0_2 = arith.constant 0 : index
    %c32 = arith.constant 32 : index
    %12 = vector.load %arg1[%c0_2, %c32] : memref<8x64xf32, #tpu.memory_space<vmem>>, vector<8x16xf32>
    %c0_3 = arith.constant 0 : index
    %c48 = arith.constant 48 : index
    %13 = vector.load %arg1[%c0_3, %c48] : memref<8x64xf32, #tpu.memory_space<vmem>>, vector<8x16xf32>
    %14 = arith.maximumf %12, %13 : vector<8x16xf32>
    %15 = arith.subf %12, %14 : vector<8x16xf32>
    %16 = math.exp %15 : vector<8x16xf32>
    %17 = arith.subf %13, %14 : vector<8x16xf32>
    %18 = math.exp %17 : vector<8x16xf32>
    %19 = arith.addf %16, %18 : vector<8x16xf32>
    %cst_4 = arith.constant 1.000000e+00 : f32
    %20 = vector.broadcast %cst_4 : f32 to vector<8x16xf32>
    %21 = arith.divf %20, %19 : vector<8x16xf32>
    %22 = arith.mulf %16, %21 : vector<8x16xf32>
    %23 = arith.mulf %18, %21 : vector<8x16xf32>
    %24 = tpu.concatenate %10, %22, %11, %23 in 1 : vector<8x16xf32>, vector<8x16xf32>, vector<8x16xf32>, vector<8x16xf32> -> vector<8x64xf32>
    %c0_5 = arith.constant 0 : index
    %c0_6 = arith.constant 0 : index
    %25 = vector.load %arg2[%c0_5, %c0_6] : memref<8x64xf32, #tpu.memory_space<vmem>>, vector<8x64xf32>
    tpu.vector_store %arg2[%c0_5, %c0_6], %24 {strides = array<i32>} : memref<8x64xf32, #tpu.memory_space<vmem>>, vector<8x64xf32>,
    return
  }
  func.func @transform_0(%arg0: i32) -> (i32, i32) {
    %c0_i32 = arith.constant 0 : i32
    %c0_i32_0 = arith.constant 0 : i32
    return %arg0, %c0_i32 : i32, i32
  }
  func.func @transform_1(%arg0: i32) -> (i32, i32) {
    %c0_i32 = arith.constant 0 : i32
    %c0_i32_0 = arith.constant 0 : i32
    return %arg0, %c0_i32 : i32, i32
  }
}

</mosaic_0001>

<llo_original>
// kernel: tpu_custom_call.1
$region0: #{tpu_custom_call.1}
  #allocation0 [shape = 'u32[]', space=smem, size = 0x4, offset = 0x4, fixed_abs, tag = 'smem constant byte address 0x4 - core index']
  #allocation1 [shape = 'u32[72,128]{1,0:T(1,128)}', space=vmem, size = 0x9000, scoped, tag = 'internal scratch']
  %s0 = inlined_call_operand.hbm [shape: f32[16,64], index: 0, kind: input, shape index: {}]
  %s1 = inlined_call_operand.hbm [shape: f32[16,64], index: 1, kind: output, shape index: {}]
  %s2 = sld [smem:[#allocation0]]
  $region41: #{tpu_custom_call.1} parent=0
    _
  %s4 = ssub.s32 1, %s2
  %s5 = scalar_select 0, %s4, %s2
  $region1: #{tpu_custom_call.1} parent=0
    #allocation2 [shape = 'u8[8192]{0}', space=vmem, size = 0x2000, scoped, tag = 'input window, operand 0']
    #allocation3 [shape = 's32[2]{0}', space=sflag, size = 0x8, scoped, tag = 'scoped memory for tpu_custom_call.1']
    #allocation4 [shape = 's32[2]{0}', space=sflag, size = 0x8, scoped, tag = 'scoped memory for tpu_custom_call.1']
    #allocation5 [shape = 'u8[8192]{0}', space=vmem, size = 0x2000, scoped, tag = 'output window, operand 0']
    %6 = vsyncpa [#allocation3], 0
    %s7 = scalar_lea.sflag [#allocation3], 1
    %8 = vsyncpa %s7, 0
    %9 = vsyncpa [#allocation4], 0
    %s10 = scalar_lea.sflag [#allocation4], 1
    %11 = vsyncpa %s10, 0
    loop: start=0, step=1, limit=4
    $region2: #{tpu_custom_call.1} parent=1 // loop_pre_header
      _
    $region3: #{tpu_custom_call.1} parent=1 // loop_header
      %s13 = sphi 0, %s17
      %p14 = scmp.ge.s32.totalorder %s13, 4
      %s23 = sphi 0, %s25
      %s26 = sphi 0, %s23
      %s27 = sphi 0, %s26
      %s43 = sphi 0, %s27
      %s49 = sphi 0, %s51
      %s52 = sphi 0, %s49
      %s53 = sphi 0, %s52
      %s69 = sphi 0, %s53
    $region4: #{tpu_custom_call.1} parent=1 // loop_header_branch
      %16 = sbr.rel (%p14) target = $region8
    $region5: #{tpu_custom_call.1} parent=1 // loop_body
      %s18 = ssub.s32 %s13, 1
      %s19 = ssub.s32 %s13, 2
      %s20 = sadd.s32 %s13, 1
      %s21 = ssub.s32 %s13, %s20
      %p22 = scmp.eq.s32.totalorder %s21, 0
      %s24 = sadd.s32 %s23, 1
      %s25 = scalar_select %p22, %s23, %s24
      %p28 = pneg %p22
      %p29 = scmp.eq.s32.totalorder %s13, 1
      %p30 = por %p28, %p29
      %p31 = scmp.ne.s32.totalorder %s23, %s26
      %p32 = scmp.eq.s32.totalorder %s13, 0
      %p33 = por %p31, %p32
      %p34 = scmp.ne.s32.totalorder %s23, %s26
      %p35 = scmp.eq.s32.totalorder %s18, 1
      %p36 = por %p34, %p35
      %p37 = scmp.ne.s32.totalorder %s26, %s27
      %p38 = scmp.eq.s32.totalorder %s18, 0
      %p39 = por %p37, %p38
      %p40 = scmp.ne.s32.totalorder %s26, %s27
      %p41 = scmp.eq.s32.totalorder %s19, 1
      %p42 = por %p40, %p41
      %p44 = scmp.ne.s32.totalorder %s27, %s43
      %p45 = scmp.eq.s32.totalorder %s19, 0
      %p46 = por %p44, %p45
      %s47 = ssub.s32 %s13, %s20
      %p48 = scmp.eq.s32.totalorder %s47, 0
      %s50 = sadd.s32 %s49, 1
      %s51 = scalar_select %p48, %s49, %s50
      %p54 = pneg %p48
      %p55 = scmp.eq.s32.totalorder %s13, 1
      %p56 = por %p54, %p55
      %p57 = scmp.ne.s32.totalorder %s49, %s52
      %p58 = scmp.eq.s32.totalorder %s13, 0
      %p59 = por %p57, %p58
      %p60 = scmp.ne.s32.totalorder %s49, %s52
      %p61 = scmp.eq.s32.totalorder %s18, 1
      %p62 = por %p60, %p61
      %p63 = scmp.ne.s32.totalorder %s52, %s53
      %p64 = scmp.eq.s32.totalorder %s18, 0
      %p65 = por %p63, %p64
      %p66 = scmp.ne.s32.totalorder %s52, %s53
      %p67 = scmp.eq.s32.totalorder %s19, 1
      %p68 = por %p66, %p67
      %p70 = scmp.ne.s32.totalorder %s53, %s69
      %p71 = scmp.eq.s32.totalorder %s19, 0
      %p72 = por %p70, %p71
      %p73 = scmp.le.s32.totalorder 1, %s13
      %p74 = scmp.lt.s32.totalorder %s13, 3
      %p75 = pnand %p73, %p74
      %p76 = pneg %p75
      // Predicated region
      $region9: #{tpu_custom_call.1} parent=5 // pred_check
        _
      $region10: #{tpu_custom_call.1} parent=5 // pred_check_branch
        %78 = sbr.rel (%p75) target = $region12
      $region11: #{tpu_custom_call.1} parent=5 // pred_region
        %s79 = ssub.s32 %s13, 1
      $region12: #{tpu_custom_call.1} parent=5 // pred_fallthru
        _
      %p80 = scmp.lt.s32.totalorder %s13, 2
      // Predicated region
      $region13: #{tpu_custom_call.1} parent=5 // pred_check
        %p81 = pneg %p80
      $region14: #{tpu_custom_call.1} parent=5 // pred_check_branch
        %83 = sbr.rel (%p81) target = $region16
      $region15: #{tpu_custom_call.1} parent=5 // pred_region
        // Predicated region
        $region17: #{tpu_custom_call.1} parent=15 // pred_check
          %p84 = pneg %p33
        $region18: #{tpu_custom_call.1} parent=15 // pred_check_branch
          %86 = sbr.rel (%p84) target = $region20
        $region19: #{tpu_custom_call.1} parent=15 // pred_region
          %s87 = sand.u32 %s23, 1
          %s88 = scalar_lea.sflag [#allocation3], %s87
          %s89 = sand.u32 %s23, 1
          %s90 = smul.addr %s89, 8
          %s91 = scalar_lea.vmem [#allocation2], %s90
          %93 = vsyncadd %s88, 0
          %s94 = smul.addr %s13, 8
          %s95 = scalar_lea.hbm %s0, %s94
          %s97 = sshll.u32 %s95, 4
          %s98 = int_to_ptr.hbm [resolvable:$true] %s97
          %s99 = sshll.u32 %s91, 4
          %s100 = int_to_ptr.vmem [resolvable:$true] %s99
          %102 = dma.hbm_to_vmem [thread:$0]  %s98, 128, %s100, %s88
        $region20: #{tpu_custom_call.1} parent=15 // pred_fallthru
          _
      $region16: #{tpu_custom_call.1} parent=5 // pred_fallthru
        _
      %p103 = scmp.le.s32.totalorder 1, %s13
      %p104 = scmp.lt.s32.totalorder %s13, 3
      %p105 = pnand %p103, %p104
      %p106 = pneg %p105
      // Predicated region
      $region21: #{tpu_custom_call.1} parent=5 // pred_check
        _
      $region22: #{tpu_custom_call.1} parent=5 // pred_check_branch
        %108 = sbr.rel (%p105) target = $region24
      $region23: #{tpu_custom_call.1} parent=5 // pred_region
        %s109 = ssub.s32 %s13, 1
        %s110 = sand.u32 %s26, 1
        %s111 = scalar_lea.sflag [#allocation3], %s110
        %s112 = sand.u32 %s26, 1
        %s113 = smul.addr %s112, 8
        %s114 = scalar_lea.vmem [#allocation2], %s113
        // Predicated region
        $region25: #{tpu_custom_call.1} parent=23 // pred_check
          %p115 = pneg %p39
        $region26: #{tpu_custom_call.1} parent=23 // pred_check_branch
          %117 = sbr.rel (%p115) target = $region28
        $region27: #{tpu_custom_call.1} parent=23 // pred_region
          %119 = dma.done %s111, 128
        $region28: #{tpu_custom_call.1} parent=23 // pred_fallthru
          _
        %s120 = sand.u32 %s26, 1
        %s121 = scalar_lea.sflag [#allocation3], %s120
        %s122 = sand.u32 %s26, 1
        %s123 = smul.addr %s122, 8
        %s124 = scalar_lea.vmem [#allocation2], %s123
        %p125 = pneg %p39
        %p126 = pneg %p36
        %p127 = pneg %p65
        %p128 = pneg %p62
        %s129 = sand.u32 %s52, 1
        %s130 = scalar_lea.sflag [#allocation4], %s129
        %s131 = sand.u32 %s52, 1
        %s132 = smul.addr %s131, 8
        %s133 = scalar_lea.vmem [#allocation5], %s132
        %v134 = vld [vmem:[%s114] sm:$0xff]
        %136 = vrot.lane.b32.xlu0 %v134, 112
        %v137 = vpop.permute.xlu0 %136
        %v139 = vmax.f32 %v134, %v137
        %v140 = vsub.f32 %v134, %v139
        %v141 = vmul.f32 %v140, 1.442695
        %v142 = vpow.pop %v141
        %144 = vrot.lane.b32.xlu0 %v139, 16
        %v145 = vpop.permute.xlu0 %144
        %v147 = vsub.f32 %v134, %v145
        %v148 = vmul.f32 %v147, 1.442695
        %v149 = vpow.pop %v148
        %151 = vrot.lane.b32.xlu0 %v149, 112
        %v152 = vpop.permute.xlu0 %151
        %v154 = vadd.f32 %v142, %v152
        %v155 = vrcp.pop %v154
        %v156 = vmul.f32 %v154, %v155
        %v157 = vsub.f32 1.0, %v156
        %v158 = vmul.f32 %v155, %v157
        %v159 = vadd.f32 %v155, %v158
        %vm160 = vweird.f32 %v154
        %vm161 = vweird.f32 %v155
        %vm162 = vmor %vm160, %vm161
        %v163 = vsel %vm162, %v155, %v159
        %v164 = vand.u32 2147483647, %v154
        %vm165 = vcmp.eq.f32.partialorder %v164, 8.507059e+37
        %v166 = vand.u32 %v154, 2147483648
        %v167 = vor.u32 1.1754944e-38, %v166
        %v168 = vsel %vm165, %v167, %v163
        %v169 = vmul.f32 1.0, %v168
        %v170 = vmul.f32 %v142, %v169
        %172 = vrot.lane.b32.xlu0 %v169, 16
        %v173 = vpop.permute.xlu0 %172
        %v175 = vmul.f32 %v149, %v173
        %177 = vrot.lane.b32.xlu0 %v170, 112
        %v178 = vpop.permute.xlu0 %177
        %181 = vrot.lane.b32.xlu0 %v175, 16
        %v182 = vpop.permute.xlu0 %181
        %vm184 = vcmask 130048
        %v185 = vsel %vm184, %v170, %v178
        %vm186 = vcmask 261120
        %v187 = vsel %vm186, %v185, %v182
        %vm188 = vcmask 392192
        %v189 = vsel %vm188, %v187, %v175
        %vm190 = vcmask 523264
        %191 = vst.msk [vmem:[%s133] sm:$0xff] %vm190, %v189
        %s192 = sand.u32 %s52, 1
        %s193 = scalar_lea.sflag [#allocation4], %s192
        %s194 = sand.u32 %s52, 1
        %s195 = smul.addr %s194, 8
        %s196 = scalar_lea.vmem [#allocation5], %s195
        // Predicated region
        $region29: #{tpu_custom_call.1} parent=23 // pred_check
          %p197 = pneg %p62
        $region30: #{tpu_custom_call.1} parent=23 // pred_check_branch
          %199 = sbr.rel (%p197) target = $region32
        $region31: #{tpu_custom_call.1} parent=23 // pred_region
          %201 = vsyncadd %s193, 0
          %s202 = smul.addr %s18, 8
          %s203 = scalar_lea.hbm %s1, %s202
          %s205 = sshll.u32 %s196, 4
          %s206 = int_to_ptr.vmem [resolvable:$true] %s205
          %s207 = sshll.u32 %s203, 4
          %s208 = int_to_ptr.hbm [resolvable:$true] %s207
          %210 = dma.vmem_to_hbm [thread:$0]  %s206, 128, %s208, %s193
        $region32: #{tpu_custom_call.1} parent=23 // pred_fallthru
          _
      $region24: #{tpu_custom_call.1} parent=5 // pred_fallthru
        _
      %p211 = scmp.le.s32.totalorder 2, %s13
      // Predicated region
      $region33: #{tpu_custom_call.1} parent=5 // pred_check
        %p212 = pneg %p211
      $region34: #{tpu_custom_call.1} parent=5 // pred_check_branch
        %214 = sbr.rel (%p212) target = $region36
      $region35: #{tpu_custom_call.1} parent=5 // pred_region
        %s215 = ssub.s32 %s13, 2
        // Predicated region
        $region37: #{tpu_custom_call.1} parent=35 // pred_check
          %p216 = pneg %p68
        $region38: #{tpu_custom_call.1} parent=35 // pred_check_branch
          %218 = sbr.rel (%p216) target = $region40
        $region39: #{tpu_custom_call.1} parent=35 // pred_region
          %s219 = sand.u32 %s53, 1
          %s220 = scalar_lea.sflag [#allocation4], %s219
          %s221 = sand.u32 %s53, 1
          %s222 = smul.addr %s221, 8
          %s223 = scalar_lea.vmem [#allocation5], %s222
          %225 = dma.done %s220, 128
        $region40: #{tpu_custom_call.1} parent=35 // pred_fallthru
          _
      $region36: #{tpu_custom_call.1} parent=5 // pred_fallthru
        _
    $region6: #{tpu_custom_call.1} parent=1 // loop_footer
      %s17 = sadd.s32 1, %s13
    $region7: #{tpu_custom_call.1} parent=1 // loop_footer_branch
      %12 = sbr.rel target = $region3
    $region8: #{tpu_custom_call.1} parent=1 // loop_exit
      _
    %226 = vsyncpa [#allocation3], 1
    %s227 = scalar_lea.sflag [#allocation3], 1
    %228 = vsyncpa %s227, 1
    %229 = vsyncpa [#allocation4], 1
    %s230 = scalar_lea.sflag [#allocation4], 1
    %231 = vsyncpa %s230, 1

</llo_original>
